<compile_context>
chip_gen: v7x
topology: tpu7x:2x2x1
jax: 0.10.0
libtpu: 0.0.40
codegen_flags: <defaults>
</compile_context>

<pallas_src>
import numpy as np
import jax
import jax.numpy as jnp
from jax import lax
from jax.experimental import pallas as pl
from jax.experimental.pallas import tpu as pltpu

LANE = 128      # lane width; node axis padded to a multiple of this
TC = 32         # ego-graph centers per grid step (int8 mask sublane tile = 32)
NEG = -1e30     # f32 mask value (kept out of any bf16 path)


def _vmem_limit_bytes():
    cap = 128 * 1024 * 1024
    try:
        cap = int(getattr(pltpu.get_tpu_info(), "vmem_capacity_bytes", cap))
    except Exception:
        pass
    # ~3/4 of physical VMEM: ~48 MiB on v7x (64 MiB), ~96 MiB on v5e/v6e (128 MiB)
    return int(min((cap * 3) // 4, 112 * 1024 * 1024))


_VMEM_LIMIT = _vmem_limit_bytes()


def _compiler_params():
    return pltpu.CompilerParams(
        dimension_semantics=("parallel",),          # shard grid across TCs (v7x)
        vmem_limit_bytes=_VMEM_LIMIT,
    )


def _pick_tile(n_pad, candidates):
    for t in candidates:
        if n_pad % t == 0:
            return t
    return LANE


# ---------------- kernel 1: GAT projection (h = xW, attention terms) ----------------
def gat_project_kernel(x_ref, w_ref, att_ref, h_ref, asrc_ref, adst_ref):
    h = jnp.dot(x_ref[...], w_ref[...], preferred_element_type=jnp.float32)   # [TM, D]
    att = att_ref[...]                                                        # [2, D]
    # a_src lands directly in the [1, TM] row layout kernel 2 wants (lane-dense);
    # a_dst stays in the proven (TM, 1) column layout — its store is tiny vs h.
    asrc_ref[...] = lax.dot_general(att[0:1, :], h, (((1,), (1,)), ((), ())),
                                    preferred_element_type=jnp.float32)       # [1, TM]
    adst_ref[...] = jnp.sum(h * att[1:2, :], axis=-1, keepdims=True)          # [TM, 1]
    h_ref[...] = h.astype(jnp.bfloat16)                                       # MXU operand later


def gat_project(x_bf, w_bf, att):
    n_pad, hdim = x_bf.shape
    d = w_bf.shape[1]
    tm = _pick_tile(n_pad, (1024, 512, 256, 128))   # big blocks: per-step VMEM is tiny
    return pl.pallas_call(
        gat_project_kernel,
        out_shape=(
            jax.ShapeDtypeStruct((n_pad, d), jnp.bfloat16),   # h
            jax.ShapeDtypeStruct((1, n_pad), jnp.float32),    # a_src (row layout)
            jax.ShapeDtypeStruct((n_pad, 1), jnp.float32),    # a_dst (col layout)
        ),
        grid=(n_pad // tm,),
        in_specs=[
            pl.BlockSpec((tm, hdim), lambda i: (i, 0)),
            pl.BlockSpec((hdim, d), lambda i: (0, 0)),
            pl.BlockSpec((2, d), lambda i: (0, 0)),
        ],
        out_specs=(
            pl.BlockSpec((tm, d), lambda i: (i, 0)),
            pl.BlockSpec((1, tm), lambda i: (0, i)),
            pl.BlockSpec((tm, 1), lambda i: (i, 0)),
        ),
        compiler_params=_compiler_params(),
    )(x_bf, w_bf, att)


# ------------- kernel 2: GAT edge-softmax aggregation (== conv1), row-tiled ----------
def gat_aggregate_kernel(adst_ref, asrc_ref, adj_ref, h_ref, bias_ref, out_ref):
    logits = adst_ref[...] + asrc_ref[...]                    # [TM, N] f32
    logits = jnp.maximum(logits, 0.2 * logits)                # LeakyReLU(0.2)
    logits = jnp.where(adj_ref[...] > 0, logits, NEG)         # int8 adjacency mask
    m = jnp.max(logits, axis=-1, keepdims=True)
    # masked entries underflow to exactly 0 (real rows have self loops);
    # fully-padded rows give garbage that is never consumed downstream.
    p = jnp.exp(logits - m)
    denom = jnp.sum(p, axis=-1, keepdims=True)                # >= 1 always
    # flash-style: unnormalized accumulate then scale by 1/denom (EUP reciprocal)
    acc = jnp.dot(p.astype(jnp.bfloat16), h_ref[...],
                  preferred_element_type=jnp.float32)         # [TM, D]
    out_ref[...] = acc * pl.reciprocal(denom, approx=True) + bias_ref[...]


def gat_aggregate(a_dst, a_src, adj_i8, h_bf, bias):
    n_pad = adj_i8.shape[0]
    d = h_bf.shape[1]
    tm = _pick_tile(n_pad, (256, 128))              # 256 fills the 256-wide MXU (v6e/v7x)
    return pl.pallas_call(
        gat_aggregate_kernel,
        out_shape=jax.ShapeDtypeStruct((n_pad, d), jnp.float32),
        grid=(n_pad // tm,),
        in_specs=[
            pl.BlockSpec((tm, 1), lambda i: (i, 0)),
            pl.BlockSpec((1, n_pad), lambda i: (0, 0)),
            pl.BlockSpec((tm, n_pad), lambda i: (i, 0)),      # int8 adjacency streamed
            pl.BlockSpec((n_pad, d), lambda i: (0, 0)),
            pl.BlockSpec((1, d), lambda i: (0, 0)),
        ],
        out_specs=pl.BlockSpec((tm, d), lambda i: (i, 0)),
        compiler_params=_compiler_params(),
    )(a_dst, a_src, adj_i8, h_bf, bias)


# ----------- kernel 3: per-ego-graph node scoring, TC centers per grid step ----------
def ego_score_kernel(hconv_ref, ws_ref, xorig_ref, mask_ref, adj_ref,
                     atts_ref, bs_ref, out_ref):
    # Hoisted once per block: hs[t, j] = ws . (hconv[center_t] * x_orig[j]) for all
    # TC centers with ONE thin matmul; the transposed orientation is never built.
    hw = (hconv_ref[...] * ws_ref[...]).astype(jnp.bfloat16)                  # [TC, D]
    hs_rows = lax.dot_general(hw, xorig_ref[...], (((1,), (1,)), ((), ())),
                              preferred_element_type=jnp.float32)             # [TC, N]
    mask_f = mask_ref[...].astype(jnp.float32)                                # [TC, N] 0/1
    a_src = atts_ref[0]
    a_dst = atts_ref[1]
    bias = bs_ref[0]
    row_is0 = lax.broadcasted_iota(jnp.int32, (2, 1), 0) == 0                 # [2, 1]

    def center_body(t, carry):
        # one-hot row/col selection: no dynamic lane slicing, no transposes.
        oh_row = (lax.broadcasted_iota(jnp.int32, (1, TC), 1) == t).astype(jnp.float32)
        oh_col = (lax.broadcasted_iota(jnp.int32, (TC, 1), 0) == t).astype(jnp.float32)
        hs_row = lax.dot_general(oh_row, hs_rows, (((1,), (0,)), ((), ())),
                                 preferred_element_type=jnp.float32)          # [1, N]
        hs_col = lax.dot_general(hs_rows, oh_col, (((0,), (0,)), ((), ())),
                                 preferred_element_type=jnp.float32)          # [N, 1]
        mrow = lax.dot_general(oh_row, mask_f, (((1,), (0,)), ((), ())),
                               preferred_element_type=jnp.float32)            # [1, N] 0/1

        keep = (adj_ref[...] > 0) & (mrow > 0)          # edges whose source is in the ego graph
        logits = a_dst * hs_col + a_src * hs_row                              # [N, N]
        logits = jnp.maximum(logits, 0.2 * logits)                            # LeakyReLU(0.2)
        logits = jnp.where(keep, logits, NEG)
        m = jnp.max(logits, axis=-1, keepdims=True)
        # exp(NEG - m) underflows to 0 for every row with >=1 kept edge; rows with no
        # kept edges (out-of-ego / padded destinations) give garbage masked out below.
        p = jnp.exp(logits - m).astype(jnp.bfloat16)                          # [N, N] bf16

        # fused reduction: row 0 -> unnormalized aggregate, row 1 -> softmax denom,
        # both with the destination index on LANES (lane-dense row store).
        lhs = jnp.where(row_is0, hs_row, 1.0).astype(jnp.bfloat16)            # [2, N]
        red = lax.dot_general(lhs, p, (((1,), (1,)), ((), ())),
                              preferred_element_type=jnp.float32)             # [2, N]
        score = jnp.tanh(red[0:1, :] * pl.reciprocal(red[1:2, :], approx=True) + bias)
        out_ref[pl.ds(t, 1), :] = score * mrow          # zero nodes outside this ego graph
        return carry

    lax.fori_loop(0, TC, center_body, 0)                # bounds live [N,N] temps to 1 center


def ego_scores(hconv, ws, x_orig_bf, masks_i8, adj_i8, att_s, b_s):
    n_pad, d = hconv.shape
    return pl.pallas_call(
        ego_score_kernel,
        out_shape=jax.ShapeDtypeStruct((n_pad, n_pad), jnp.float32),
        grid=(n_pad // TC,),
        in_specs=[
            pl.BlockSpec((TC, d), lambda i: (i, 0)),          # conv features of centers
            pl.BlockSpec((1, d), lambda i: (0, 0)),           # scorer weight ws
            pl.BlockSpec((n_pad, d), lambda i: (0, 0)),       # x_orig (bf16, resident)
            pl.BlockSpec((TC, n_pad), lambda i: (i, 0)),      # k-hop masks (int8, center rows)
            pl.BlockSpec((n_pad, n_pad), lambda i: (0, 0)),   # adjacency (int8, resident)
            pl.BlockSpec(memory_space=pltpu.MemorySpace.SMEM),
            pl.BlockSpec(memory_space=pltpu.MemorySpace.SMEM),
        ],
        out_specs=pl.BlockSpec((TC, n_pad), lambda i: (i, 0)),
        compiler_params=_compiler_params(),
    )(hconv, ws, x_orig_bf, masks_i8, adj_i8, att_s, b_s)


# -------------------------------------- glue -----------------------------------------
def k_hop_masks(adj_noself, k):
    """masks[c, j] = 1 iff node j is within k hops of center c (source->target flow)."""
    n = adj_noself.shape[0]
    m = jnp.eye(n, dtype=jnp.float32)
    for _ in range(k):
        m = jnp.clip(m + m @ adj_noself, 0.0, 1.0)
    return m


def init_params(key, hidden_dim, input_dim):
    ks = jax.random.split(key, 6)
    return {
        "W1": 0.1 * jax.random.normal(ks[0], (hidden_dim, input_dim), jnp.float32),
        "att1": 0.1 * jax.random.normal(ks[1], (2, input_dim), jnp.float32),
        "b1": 0.01 * jax.random.normal(ks[2], (1, input_dim), jnp.float32),
        "Ws": 0.1 * jax.random.normal(ks[3], (1, input_dim), jnp.float32),
        "atts": 0.5 * jax.random.normal(ks[4], (2,), jnp.float32),
        "bs": 0.01 * jax.random.normal(ks[5], (1,), jnp.float32),
    }


def pruning_unit_forward(x, x_orig, edge_index, batch, params, k):
    n, hdim = x.shape
    d = x_orig.shape[1]
    n_pad = ((n + LANE - 1) // LANE) * LANE                  # lane-dense node axis

    src, dst = edge_index[0], edge_index[1]
    a = jnp.zeros((n_pad, n_pad), jnp.float32).at[dst, src].set(1.0)  # A[i,j]: edge j->i
    eye_real = jnp.zeros((n_pad,), jnp.float32).at[:n].set(1.0)
    a_self = jnp.maximum(a, jnp.diag(eye_real))              # self loops on real nodes

    x_p = jnp.zeros((n_pad, hdim), jnp.float32).at[:n, :].set(x)
    xo_p = jnp.zeros((n_pad, d), jnp.float32).at[:n, :].set(x_orig)

    masks = k_hop_masks(a, k)                                # k_hop_subgraph membership (f32 0/1)
    masks_i8 = masks.astype(jnp.int8)                        # int8 stream/resident buffers
    adj_i8 = a_self.astype(jnp.int8)

    # conv1: GATConv(hidden_dim -> input_dim), tiled over destination-row blocks
    h_bf, a_src, a_dst = gat_project(x_p.astype(jnp.bfloat16),
                                     params["W1"].astype(jnp.bfloat16),
                                     params["att1"])
    hconv = gat_aggregate(a_dst, a_src, adj_i8, h_bf, params["b1"])

    # pool-layer scoring for every ego graph, TC centers per grid step
    scores = ego_scores(hconv, params["Ws"], xo_p.astype(jnp.bfloat16),
                        masks_i8, adj_i8, params["atts"], params["bs"])
    scores = jax.block_until_ready(scores)

    # Device-side per-ego ranking: masked top-k (ties -> lower index, like the
    # stable argsort reference) + sigmoid on device; host only slices lists.
    mask_real = masks[:n, :n] > 0
    sizes = np.asarray(jax.device_get(jnp.sum(mask_real.astype(jnp.int32), axis=1)))
    n_keep = np.ceil(0.5 * sizes).astype(np.int64)           # top-k ratio 0.5
    kmax = int(n_keep.max())
    masked_scores = jnp.where(mask_real, scores[:n, :n], -jnp.inf)
    top_vals, top_idx = lax.top_k(masked_scores, kmax)       # [n, kmax]
    top_sel = jax.nn.sigmoid(top_vals)                       # self.sigmoid on device
    top_sel = np.asarray(jax.device_get(top_sel))
    top_idx = np.asarray(jax.device_get(top_idx))

    batch_np = np.asarray(jax.device_get(batch))
    subgraph_list, ego_nodes = [], []
    for b in np.unique(batch_np):
        for node in np.nonzero(batch_np == b)[0]:
            kk = int(n_keep[node])
            sel = top_sel[node, :kk].astype(np.float32)
            nodes_sel = top_idx[node, :kk]
            assert len(sel) == len(nodes_sel)
            subgraph_list.append(sel)
            ego_nodes.append(nodes_sel)
    return subgraph_list, ego_nodes


if __name__ == "__main__":
    key = jax.random.PRNGKey(0)
    N, H, D, K = 16, 32, 128, 2                    # nodes, hidden_dim, input_dim, k hops
    batch = jnp.array([0] * 8 + [1] * 8, dtype=jnp.int32)

    # deterministic graph: a bidirectional ring inside each of the 2 graphs
    edges = []
    for g in range(2):
        off = g * 8
        for i in range(8):
            u, v = off + i, off + (i + 1) % 8
            edges.append((u, v))
            edges.append((v, u))
    edge_index = jnp.array(np.array(edges, dtype=np.int32).T)      # [2, E]

    kx, ko, kp = jax.random.split(key, 3)
    x = jax.random.normal(kx, (N, H), jnp.float32)
    x_orig = jax.random.normal(ko, (N, D), jnp.float32)
    params = init_params(kp, H, D)

    subgraph_list, ego_nodes = pruning_unit_forward(x, x_orig, edge_index, batch,
                                                    params, K)

    assert len(subgraph_list) == N and len(ego_nodes) == N
    for s, e in zip(subgraph_list, ego_nodes):
        assert s.shape == e.shape and s.size > 0
        assert np.all((s > 0.0) & (s < 1.0))       # sigmoid outputs
    print("KERNEL_OK")
</pallas_src>

<mosaic_0001>
module attributes {stable_mosaic.version = 11 : i64} {
  func.func @gat_project_kernel(%arg0: i32, %arg1: memref<128x32xbf16, #tpu.memory_space<vmem>>, %arg2: memref<32x128xbf16, #tpu.memory_space<vmem>>, %arg3: memref<2x128xf32, #tpu.memory_space<vmem>>, %arg4: memref<128x128xbf16, #tpu.memory_space<vmem>>, %arg5: memref<1x128xf32, #tpu.memory_space<vmem>>, %arg6: memref<128x1xf32, #tpu.memory_space<vmem>>) attributes {dimension_semantics = [#tpu.dimension_semantics<parallel>], iteration_bounds = array<i64: 1>, scalar_prefetch = 0 : i64, scratch_operands = 0 : i64, tpu.core_type = #tpu.core_type<tc>, window_params = [{transform_indices = @transform_0, window_bounds = array<i64: 128, 32>}, {pipeline_mode = #tpu.pipeline_mode<synchronous>, transform_indices = @transform_1, window_bounds = array<i64: 32, 128>}, {pipeline_mode = #tpu.pipeline_mode<synchronous>, transform_indices = @transform_2, window_bounds = array<i64: 2, 128>}, {transform_indices = @transform_3, window_bounds = array<i64: 128, 128>}, {transform_indices = @transform_4, window_bounds = array<i64: 1, 128>}, {transform_indices = @transform_5, window_bounds = array<i64: 128, 1>}]} {
    %c0 = arith.constant 0 : index
    %c0_0 = arith.constant 0 : index
    %0 = vector.load %arg1[%c0, %c0_0] : memref<128x32xbf16, #tpu.memory_space<vmem>>, vector<128x32xbf16>
    %c0_1 = arith.constant 0 : index
    %c0_2 = arith.constant 0 : index
    %1 = vector.load %arg2[%c0_1, %c0_2] : memref<32x128xbf16, #tpu.memory_space<vmem>>, vector<32x128xbf16>
    %cst = arith.constant dense<0.000000e+00> : vector<128x128xf32>
    %2 = tpu.matmul %0, %1, %cst {dimension_numbers = #tpu.dot_dimension_numbers<[1], [0], [0], [1], [0, 0, 1, 1], [], []>} : vector<128x32xbf16>, vector<32x128xbf16>, vector<128x128xf32> -> vector<128x128xf32>
    %c0_3 = arith.constant 0 : index
    %c0_4 = arith.constant 0 : index
    %3 = vector.load %arg3[%c0_3, %c0_4] : memref<2x128xf32, #tpu.memory_space<vmem>>, vector<2x128xf32>
    %4 = vector.extract_strided_slice %3 {offsets = [0, 0], sizes = [1, 128], strides = [1, 1]} : vector<2x128xf32> to vector<1x128xf32>
    %cst_5 = arith.constant dense<0.000000e+00> : vector<1x128xf32>
    %5 = tpu.matmul %4, %2, %cst_5 {dimension_numbers = #tpu.dot_dimension_numbers<[1], [1], [0], [0], [0, 0, 1, 0], [], []>} : vector<1x128xf32>, vector<128x128xf32>, vector<1x128xf32> -> vector<1x128xf32>
    %c0_6 = arith.constant 0 : index
    %c0_7 = arith.constant 0 : index
    %6 = vector.load %arg5[%c0_6, %c0_7] : memref<1x128xf32, #tpu.memory_space<vmem>>, vector<1x128xf32>
    tpu.vector_store %arg5[%c0_6, %c0_7], %5 {strides = array<i32>} : memref<1x128xf32, #tpu.memory_space<vmem>>, vector<1x128xf32>,
    %7 = vector.extract_strided_slice %3 {offsets = [1, 0], sizes = [1, 128], strides = [1, 1]} : vector<2x128xf32> to vector<1x128xf32>
    %8 = vector.broadcast %7 : vector<1x128xf32> to vector<128x128xf32>
    %9 = arith.mulf %2, %8 : vector<128x128xf32>
    %cst_8 = arith.constant dense<0.000000e+00> : vector<128xf32>
    %10 = vector.multi_reduction <add>, %9, %cst_8 [1] : vector<128x128xf32> to vector<128xf32>
    %11 = vector.shape_cast %10 : vector<128xf32> to vector<128x1xf32>
    %c0_9 = arith.constant 0 : index
    %c0_10 = arith.constant 0 : index
    %12 = vector.load %arg6[%c0_9, %c0_10] : memref<128x1xf32, #tpu.memory_space<vmem>>, vector<128x1xf32>
    tpu.vector_store %arg6[%c0_9, %c0_10], %11 {strides = array<i32>} : memref<128x1xf32, #tpu.memory_space<vmem>>, vector<128x1xf32>,
    %13 = arith.truncf %2 : vector<128x128xf32> to vector<128x128xbf16>
    %c0_11 = arith.constant 0 : index
    %c0_12 = arith.constant 0 : index
    %14 = vector.load %arg4[%c0_11, %c0_12] : memref<128x128xbf16, #tpu.memory_space<vmem>>, vector<128x128xbf16>
    tpu.vector_store %arg4[%c0_11, %c0_12], %13 {strides = array<i32>} : memref<128x128xbf16, #tpu.memory_space<vmem>>, vector<128x128xbf16>,
    return
  }
  func.func @transform_0(%arg0: i32) -> (i32, i32) {
    %c0_i32 = arith.constant 0 : i32
    %c0_i32_0 = arith.constant 0 : i32
    return %arg0, %c0_i32 : i32, i32
  }
  func.func @transform_1(%arg0: i32) -> (i32, i32) {
    %c0_i32 = arith.constant 0 : i32
    %c0_i32_0 = arith.constant 0 : i32
    %c0_i32_1 = arith.constant 0 : i32
    return %c0_i32, %c0_i32_0 : i32, i32
  }
  func.func @transform_2(%arg0: i32) -> (i32, i32) {
    %c0_i32 = arith.constant 0 : i32
    %c0_i32_0 = arith.constant 0 : i32
    %c0_i32_1 = arith.constant 0 : i32
    return %c0_i32, %c0_i32_0 : i32, i32
  }
  func.func @transform_3(%arg0: i32) -> (i32, i32) {
    %c0_i32 = arith.constant 0 : i32
    %c0_i32_0 = arith.constant 0 : i32
    return %arg0, %c0_i32 : i32, i32
  }
  func.func @transform_4(%arg0: i32) -> (i32, i32) {
    %c0_i32 = arith.constant 0 : i32
    %c0_i32_0 = arith.constant 0 : i32
    return %c0_i32, %arg0 : i32, i32
  }
  func.func @transform_5(%arg0: i32) -> (i32, i32) {
    %c0_i32 = arith.constant 0 : i32
    %c0_i32_0 = arith.constant 0 : i32
    return %arg0, %c0_i32 : i32, i32
  }
}

</mosaic_0001>

<llo_original>
// kernel: tpu_custom_call.1
$region0: #{tpu_custom_call.1}
  #allocation0 [shape = 'u32[]', space=smem, size = 0x4, offset = 0x4, fixed_abs, tag = 'smem constant byte address 0x4 - core index']
  #allocation1 [shape = 'u32[144,128]{1,0:T(1,128)}', space=vmem, size = 0x12000, scoped, tag = 'internal scratch']
  %s0 = inlined_call_operand.hbm [shape: bf16[128,32], index: 0, kind: input, shape index: {}]
  %s1 = inlined_call_operand.hbm [shape: bf16[32,128], index: 1, kind: input, shape index: {}]
  %s2 = inlined_call_operand.hbm [shape: f32[2,128], index: 2, kind: input, shape index: {}]
  %s3 = inlined_call_operand.hbm [shape: bf16[128,128], index: 3, kind: output, shape index: {0}]
  %s4 = inlined_call_operand.hbm [shape: f32[1,128], index: 4, kind: output, shape index: {1}]
  %s5 = inlined_call_operand.hbm [shape: f32[128,1], index: 5, kind: output, shape index: {2}]
  %6 = xla_tuple %s3, %s4, %s5
  %s7 = sld [smem:[#allocation0]]
  $region50: #{tpu_custom_call.1} parent=0
    _
  %s9 = ssub.s32 1, %s7
  %s10 = scalar_select 0, %s9, %s7
  $region1: #{tpu_custom_call.1} parent=0
    #allocation2 [shape = 'u8[32768]{0}', space=vmem, size = 0x8000, scoped, tag = 'input window, operand 0, single buffered']
    #allocation3 [shape = 's32[1]{0}', space=sflag, size = 0x4, scoped, tag = 'scoped memory for tpu_custom_call.1']
    #allocation4 [shape = 's32[1]{0}', space=sflag, size = 0x4, scoped, tag = 'scoped memory for tpu_custom_call.1']
    #allocation5 [shape = 'u8[8192]{0}', space=vmem, size = 0x2000, scoped, tag = 'input window, operand 1, single buffered']
    #allocation6 [shape = 's32[1]{0}', space=sflag, size = 0x4, scoped, tag = 'scoped memory for tpu_custom_call.1']
    #allocation7 [shape = 'u8[1024]{0}', space=vmem, size = 0x400, scoped, tag = 'input window, operand 2, single buffered']
    #allocation8 [shape = 'u8[32768]{0}', space=vmem, size = 0x8000, scoped, tag = 'output window, operand 0, single buffered']
    #allocation9 [shape = 'u8[512]{0}', space=vmem, size = 0x400, scoped, tag = 'output window, operand 1, single buffered']
    #allocation10 [shape = 's32[1]{0}', space=sflag, size = 0x4, scoped, tag = 'scoped memory for tpu_custom_call.1']
    #allocation11 [shape = 'u8[65536]{0}', space=vmem, size = 0x10000, scoped, tag = 'output window, operand 2, single buffered']
    %11 = vsyncpa [#allocation3], 0
    %12 = vsyncpa [#allocation6], 0
    %13 = vsyncpa [#allocation4], 0
    %14 = vsyncpa [#allocation10], 0
    // Predicated region
    $region2: #{tpu_custom_call.1} parent=1 // pred_check
      _
    $region3: #{tpu_custom_call.1} parent=1 // pred_check_branch
      %16 = sbr.rel (0) target = $region5
    $region4: #{tpu_custom_call.1} parent=1 // pred_region
      %s18 = ssub.s32 1024, 1024
      %19 = vsyncadd [#allocation3], %s18
      %s20 = sshll.u32 [#allocation2], 4
      %s21 = int_to_ptr.vmem [resolvable:$true] %s20
      %26 = dma.hbm_to_vmem [thread:$0]  %s0, 1024, %s21, [#allocation3], 64, 64, 4
    $region5: #{tpu_custom_call.1} parent=1 // pred_fallthru
      _
    // Predicated region
    $region6: #{tpu_custom_call.1} parent=1 // pred_check
      _
    $region7: #{tpu_custom_call.1} parent=1 // pred_check_branch
      %28 = sbr.rel (0) target = $region9
    $region8: #{tpu_custom_call.1} parent=1 // pred_region
      %s30 = ssub.s32 256, 256
      %31 = vsyncadd [#allocation6], %s30
      %s32 = sshll.u32 [#allocation5], 4
      %s33 = int_to_ptr.vmem [resolvable:$true] %s32
      %38 = dma.hbm_to_vmem [thread:$0]  %s1, 256, %s33, [#allocation6], 64, 64, 4
    $region9: #{tpu_custom_call.1} parent=1 // pred_fallthru
      _
    // Predicated region
    $region10: #{tpu_custom_call.1} parent=1 // pred_check
      _
    $region11: #{tpu_custom_call.1} parent=1 // pred_check_branch
      %40 = sbr.rel (0) target = $region13
    $region12: #{tpu_custom_call.1} parent=1 // pred_region
      %s42 = ssub.s32 32, 32
      %43 = vsyncadd [#allocation6], %s42
      %s45 = sshll.u32 [#allocation7], 4
      %s46 = int_to_ptr.vmem [resolvable:$true] %s45
      %48 = dma.hbm_to_vmem [thread:$0]  %s2, 32, %s46, [#allocation6]
    $region13: #{tpu_custom_call.1} parent=1 // pred_fallthru
      _
    // Predicated region
    $region14: #{tpu_custom_call.1} parent=1 // pred_check
      _
    $region15: #{tpu_custom_call.1} parent=1 // pred_check_branch
      %50 = sbr.rel (0) target = $region17
    $region16: #{tpu_custom_call.1} parent=1 // pred_region
      %51 = dma.done [#allocation3], 1024
    $region17: #{tpu_custom_call.1} parent=1 // pred_fallthru
      _
    // Predicated region
    $region18: #{tpu_custom_call.1} parent=1 // pred_check
      _
    $region19: #{tpu_custom_call.1} parent=1 // pred_check_branch
      %53 = sbr.rel (0) target = $region21
    $region20: #{tpu_custom_call.1} parent=1 // pred_region
      %54 = dma.done [#allocation6], 256
    $region21: #{tpu_custom_call.1} parent=1 // pred_fallthru
      _
    // Predicated region
    $region22: #{tpu_custom_call.1} parent=1 // pred_check
      _
    $region23: #{tpu_custom_call.1} parent=1 // pred_check_branch
      %56 = sbr.rel (0) target = $region25
    $region24: #{tpu_custom_call.1} parent=1 // pred_region
      %57 = dma.done [#allocation6], 32
    $region25: #{tpu_custom_call.1} parent=1 // pred_fallthru
      _
    %v59 = vld [vmem:[#allocation2] sm:$0xf]
    %v60 = vld [vmem:[#allocation2 + $0x4] sm:$0xf]
    %v61 = vld [vmem:[#allocation2 + $0x8] sm:$0xf]
    %v62 = vld [vmem:[#allocation2 + $0xc] sm:$0xf]
    %v63 = vld [vmem:[#allocation2 + $0x10] sm:$0xf]
    %v64 = vld [vmem:[#allocation2 + $0x14] sm:$0xf]
    %v65 = vld [vmem:[#allocation2 + $0x18] sm:$0xf]
    %v66 = vld [vmem:[#allocation2 + $0x1c] sm:$0xf]
    %v67 = vld [vmem:[#allocation2 + $0x20] sm:$0xf]
    %v68 = vld [vmem:[#allocation2 + $0x24] sm:$0xf]
    %v69 = vld [vmem:[#allocation2 + $0x28] sm:$0xf]
    %v70 = vld [vmem:[#allocation2 + $0x2c] sm:$0xf]
    %v71 = vld [vmem:[#allocation2 + $0x30] sm:$0xf]
    %v72 = vld [vmem:[#allocation2 + $0x34] sm:$0xf]
    %v73 = vld [vmem:[#allocation2 + $0x38] sm:$0xf]
    %v74 = vld [vmem:[#allocation2 + $0x3c] sm:$0xf]
    %v75 = vld [vmem:[#allocation5] sm:$0xf]
    %v76 = vld [vmem:[#allocation5 + $0x4] sm:$0xf]
    %v77 = vld [vmem:[#allocation5 + $0x8] sm:$0xf]
    %v78 = vld [vmem:[#allocation5 + $0xc] sm:$0xf]
    %v95 = vunpack.c.l.b16 %v59
    %v96 = vunpack.c.l.b16 %v60
    %v97 = vunpack.c.l.b16 %v61
    %v98 = vunpack.c.l.b16 %v62
    %v99 = vunpack.c.l.b16 %v63
    %v100 = vunpack.c.l.b16 %v64
    %v101 = vunpack.c.l.b16 %v65
    %v102 = vunpack.c.l.b16 %v66
    %v103 = vunpack.c.l.b16 %v67
    %v104 = vunpack.c.l.b16 %v68
    %v105 = vunpack.c.l.b16 %v69
    %v106 = vunpack.c.l.b16 %v70
    %v107 = vunpack.c.l.b16 %v71
    %v108 = vunpack.c.l.b16 %v72
    %v109 = vunpack.c.l.b16 %v73
    %v110 = vunpack.c.l.b16 %v74
    %v111 = vpack.c.b16 %v96, %v95
    %v112 = vpack.c.b16 %v98, %v97
    %v113 = vpack.c.b16 %v100, %v99
    %v114 = vpack.c.b16 %v102, %v101
    %v115 = vpack.c.b16 %v104, %v103
    %v116 = vpack.c.b16 %v106, %v105
    %v117 = vpack.c.b16 %v108, %v107
    %v118 = vpack.c.b16 %v110, %v109
    %v123 = vunpack.c.l.b16 %v75
    %v124 = vunpack.c.l.b16 %v76
    %v125 = vunpack.c.l.b16 %v77
    %v126 = vunpack.c.l.b16 %v78
    %v127 = vpack.c.b16 %v124, %v123
    %v128 = vpack.c.b16 %v126, %v125
    %vm131 = vcmask 261120
    %v133 = vsel %vm131, %v111, 0
    %v136 = vsel %vm131, %v112, 0
    %v139 = vsel %vm131, %v113, 0
    %v142 = vsel %vm131, %v114, 0
    %v145 = vsel %vm131, %v115, 0
    %v148 = vsel %vm131, %v116, 0
    %v151 = vsel %vm131, %v117, 0
    %v154 = vsel %vm131, %v118, 0
    %156 = vmatprep.subr.bf16.mxu0 0
    %157 = vmatpush1.bf16.msra.mxu0 %v127
    %158 = vmatprep.subr.bf16.mxu0 0
    %159 = vmatpush1.bf16.msra.mxu0 %v128
    %160 = vmatprep.subr.bf16.mxu0 0
    %161 = vmatpush1.bf16.msra.mxu0 0
    %162 = vmatprep.subr.bf16.mxu0 0
    %163 = vmatpush1.bf16.msra.mxu0 0
    %164 = vmatprep.subr.bf16.mxu0 0
    %165 = vmatpush1.bf16.msra.mxu0 0
    %166 = vmatprep.subr.bf16.mxu0 0
    %167 = vmatpush1.bf16.msra.mxu0 0
    %168 = vmatprep.subr.bf16.mxu0 0
    %169 = vmatpush1.bf16.msra.mxu0 0
    %170 = vmatprep.subr.bf16.mxu0 0
    %171 = vmatpush1.bf16.msra.mxu0 0
    %172 = vmatprep.subr.bf16.mxu0 0
    %173 = vmatpush1.bf16.msra.mxu0 0
    %174 = vmatprep.subr.bf16.mxu0 0
    %175 = vmatpush1.bf16.msra.mxu0 0
    %176 = vmatprep.subr.bf16.mxu0 0
    %177 = vmatpush1.bf16.msra.mxu0 0
    %178 = vmatprep.subr.bf16.mxu0 0
    %179 = vmatpush1.bf16.msra.mxu0 0
    %180 = vmatprep.subr.bf16.mxu0 0
    %181 = vmatpush1.bf16.msra.mxu0 0
    %182 = vmatprep.subr.bf16.mxu0 0
    %183 = vmatpush1.bf16.msra.mxu0 0
    %184 = vmatprep.subr.bf16.mxu0 0
    %185 = vmatpush1.bf16.msra.mxu0 0
    %186 = vmatprep.subr.bf16.mxu0 0
    %187 = vmatpush1.bf16.msra.mxu0 0
    %188 = vmatprep.mubr.bf16.mxu0 0
    %189 = vmatmul.mubr.bf16.gmra.mrb[0].mxu0 %v133
    %v190 = vpop.f32.mrb[0].mxu0
    %v191 = vadd.f32 0.0, %v190
    %v192 = vpop.f32.mrb[0].mxu0
    %v193 = vpop.f32.mrb[0].mxu0
    %v194 = vadd.f32 0.0, %v193
    %v195 = vpop.f32.mrb[0].mxu0
    %196 = vmatprep.mubr.bf16.mxu0 0
    %197 = vmatmul.mubr.bf16.gmra.mrb[0].mxu0 %v136
    %v198 = vpop.f32.mrb[0].mxu0
    %v199 = vadd.f32 0.0, %v198
    %v200 = vpop.f32.mrb[0].mxu0
    %v201 = vpop.f32.mrb[0].mxu0
    %v202 = vadd.f32 0.0, %v201
    %v203 = vpop.f32.mrb[0].mxu0
    %204 = vmatprep.mubr.bf16.mxu0 0
    %205 = vmatmul.mubr.bf16.gmra.mrb[0].mxu0 %v139
    %v206 = vpop.f32.mrb[0].mxu0
    %v207 = vadd.f32 0.0, %v206
    %v208 = vpop.f32.mrb[0].mxu0
    %v209 = vpop.f32.mrb[0].mxu0
    %v210 = vadd.f32 0.0, %v209
    %v211 = vpop.f32.mrb[0].mxu0
    %212 = vmatprep.mubr.bf16.mxu0 0
    %213 = vmatmul.mubr.bf16.gmra.mrb[0].mxu0 %v142
    %v214 = vpop.f32.mrb[0].mxu0
    %v215 = vadd.f32 0.0, %v214
    %v216 = vpop.f32.mrb[0].mxu0
    %v217 = vpop.f32.mrb[0].mxu0
    %v218 = vadd.f32 0.0, %v217
    %v219 = vpop.f32.mrb[0].mxu0
    %220 = vmatprep.mubr.bf16.mxu0 0
    %221 = vmatmul.mubr.bf16.gmra.mrb[0].mxu0 %v145
    %v222 = vpop.f32.mrb[0].mxu0
    %v223 = vadd.f32 0.0, %v222
    %v224 = vpop.f32.mrb[0].mxu0
    %v225 = vpop.f32.mrb[0].mxu0
    %v226 = vadd.f32 0.0, %v225
    %v227 = vpop.f32.mrb[0].mxu0
    %228 = vmatprep.mubr.bf16.mxu0 0
    %229 = vmatmul.mubr.bf16.gmra.mrb[0].mxu0 %v148
    %v230 = vpop.f32.mrb[0].mxu0
    %v231 = vadd.f32 0.0, %v230
    %v232 = vpop.f32.mrb[0].mxu0
    %v233 = vpop.f32.mrb[0].mxu0
    %v234 = vadd.f32 0.0, %v233
    %v235 = vpop.f32.mrb[0].mxu0
    %236 = vmatprep.mubr.bf16.mxu0 0
    %237 = vmatmul.mubr.bf16.gmra.mrb[0].mxu0 %v151
    %v238 = vpop.f32.mrb[0].mxu0
    %v239 = vadd.f32 0.0, %v238
    %v240 = vpop.f32.mrb[0].mxu0
    %v241 = vpop.f32.mrb[0].mxu0
    %v242 = vadd.f32 0.0, %v241
    %v243 = vpop.f32.mrb[0].mxu0
    %244 = vmatprep.mubr.bf16.mxu0 0
    %245 = vmatmul.mubr.bf16.gmra.mrb[0].mxu0 %v154
    %v246 = vpop.f32.mrb[0].mxu0
    %v247 = vadd.f32 0.0, %v246
    %v248 = vpop.f32.mrb[0].mxu0
    %v249 = vpop.f32.mrb[0].mxu0
    %v250 = vadd.f32 0.0, %v249
    %v251 = vpop.f32.mrb[0].mxu0
    %252 = vdwg.mxu0
    %v253 = vld [vmem:[#allocation7] sm:$0x3]
    %254 = vmatprep.subr.mxu0 0.0
    %255 = vmatpush1.xpose.msra.mxu0 %v191
    %256 = vmatprep.subr.mxu0 0.0
    %257 = vmatpush1.xpose.msra.mxu0 %v194
    %258 = vmatprep.subr.mxu0 0.0
    %259 = vmatpush1.xpose.msra.mxu0 %v199
    %260 = vmatprep.subr.mxu0 0.0
    %261 = vmatpush1.xpose.msra.mxu0 %v202
    %262 = vmatprep.subr.mxu0 0.0
    %263 = vmatpush1.xpose.msra.mxu0 %v207
    %264 = vmatprep.subr.mxu0 0.0
    %265 = vmatpush1.xpose.msra.mxu0 %v210
    %266 = vmatprep.subr.mxu0 0.0
    %267 = vmatpush1.xpose.msra.mxu0 %v215
    %268 = vmatprep.subr.mxu0 0.0
    %269 = vmatpush1.xpose.msra.mxu0 %v218
    %270 = vmatprep.subr.mxu0 0.0
    %271 = vmatpush1.xpose.msra.mxu0 %v223
    %272 = vmatprep.subr.mxu0 0.0
    %273 = vmatpush1.xpose.msra.mxu0 %v226
    %274 = vmatprep.subr.mxu0 0.0
    %275 = vmatpush1.xpose.msra.mxu0 %v231
    %276 = vmatprep.subr.mxu0 0.0
    %277 = vmatpush1.xpose.msra.mxu0 %v234
    %278 = vmatprep.subr.mxu0 0.0
    %279 = vmatpush1.xpose.msra.mxu0 %v239
    %280 = vmatprep.subr.mxu0 0.0
    %281 = vmatpush1.xpose.msra.mxu0 %v242
    %282 = vmatprep.subr.mxu0 0.0
    %283 = vmatpush1.xpose.msra.mxu0 %v247
    %284 = vmatprep.subr.mxu0 0.0
    %285 = vmatpush1.xpose.msra.mxu0 %v250
    %286 = vmatprep.subr.mxu0 0.0
    %287 = vmatpush1.xpose.msra.mxu0 0.0
    %288 = vmatprep.subr.mxu0 0.0
    %289 = vmatpush1.xpose.msra.mxu0 0.0
    %290 = vmatprep.subr.mxu0 0.0
    %291 = vmatpush1.xpose.msra.mxu0 0.0
    %292 = vmatprep.subr.mxu0 0.0
    %293 = vmatpush1.xpose.msra.mxu0 0.0
    %294 = vmatprep.subr.mxu0 0.0
    %295 = vmatpush1.xpose.msra.mxu0 0.0
    %296 = vmatprep.subr.mxu0 0.0
    %297 = vmatpush1.xpose.msra.mxu0 0.0
    %298 = vmatprep.subr.mxu0 0.0
    %299 = vmatpush1.xpose.msra.mxu0 0.0
    %300 = vmatprep.subr.mxu0 0.0
    %301 = vmatpush1.xpose.msra.mxu0 0.0
    %302 = vmatprep.subr.mxu0 0.0
    %303 = vmatpush1.xpose.msra.mxu0 0.0
    %304 = vmatprep.subr.mxu0 0.0
    %305 = vmatpush1.xpose.msra.mxu0 0.0
    %306 = vmatprep.subr.mxu0 0.0
    %307 = vmatpush1.xpose.msra.mxu0 0.0
    %308 = vmatprep.subr.mxu0 0.0
    %309 = vmatpush1.xpose.msra.mxu0 0.0
    %310 = vmatprep.subr.mxu0 0.0
    %311 = vmatpush1.xpose.msra.mxu0 0.0
    %312 = vmatprep.subr.mxu0 0.0
    %313 = vmatpush1.xpose.msra.mxu0 0.0
    %314 = vmatprep.subr.mxu0 0.0
    %315 = vmatpush1.xpose.msra.mxu0 0.0
    %316 = vmatprep.subr.mxu0 0.0
    %317 = vmatpush1.xpose.msra.mxu0 0.0
    %318 = vmatprep.mubr.f32.mxu0 0.0
    %319 = vmatmul.mubr.f32.gmra.mrb[0].mxu0 %v253
    %v320 = vpop.f32.mrb[0].mxu0
    %v321 = vadd.f32 0.0, %v320
    %v322 = vpop.f32.mrb[0].mxu0
    %323 = vdwg.mxu0
    %324 = vst [vmem:[#allocation9] sm:$0x1] %v321
    %v325 = vlaneseq
    %v326 = vshrl.u32 %v325, 7
    %v327 = vsub.s32 1, %v326
    %v328 = vrot.slane %v253, %v327
    %v329 = vmul.f32 %v191, %v328
    %v330 = vmul.f32 %v194, %v328
    %v331 = vmul.f32 %v199, %v328
    %v332 = vmul.f32 %v202, %v328
    %v333 = vmul.f32 %v207, %v328
    %v334 = vmul.f32 %v210, %v328
    %v335 = vmul.f32 %v215, %v328
    %v336 = vmul.f32 %v218, %v328
    %v337 = vmul.f32 %v223, %v328
    %v338 = vmul.f32 %v226, %v328
    %v339 = vmul.f32 %v231, %v328
    %v340 = vmul.f32 %v234, %v328
    %v341 = vmul.f32 %v239, %v328
    %v342 = vmul.f32 %v242, %v328
    %v343 = vmul.f32 %v247, %v328
    %v344 = vmul.f32 %v250, %v328
    %345 = vadd.xlane.f32.xlu0 %v329
    %v346 = vpop.xlane.xlu0 %345
    %347 = vadd.xlane.f32.xlu0 %v330
    %v348 = vpop.xlane.xlu0 %347
    %349 = vadd.xlane.f32.xlu0 %v331
    %v350 = vpop.xlane.xlu0 %349
    %351 = vadd.xlane.f32.xlu0 %v332
    %v352 = vpop.xlane.xlu0 %351
    %353 = vadd.xlane.f32.xlu0 %v333
    %v354 = vpop.xlane.xlu0 %353
    %355 = vadd.xlane.f32.xlu0 %v334
    %v356 = vpop.xlane.xlu0 %355
    %357 = vadd.xlane.f32.xlu0 %v335
    %v358 = vpop.xlane.xlu0 %357
    %359 = vadd.xlane.f32.xlu0 %v336
    %v360 = vpop.xlane.xlu0 %359
    %361 = vadd.xlane.f32.xlu0 %v337
    %v362 = vpop.xlane.xlu0 %361
    %363 = vadd.xlane.f32.xlu0 %v338
    %v364 = vpop.xlane.xlu0 %363
    %365 = vadd.xlane.f32.xlu0 %v339
    %v366 = vpop.xlane.xlu0 %365
    %367 = vadd.xlane.f32.xlu0 %v340
    %v368 = vpop.xlane.xlu0 %367
    %369 = vadd.xlane.f32.xlu0 %v341
    %v370 = vpop.xlane.xlu0 %369
    %371 = vadd.xlane.f32.xlu0 %v342
    %v372 = vpop.xlane.xlu0 %371
    %373 = vadd.xlane.f32.xlu0 %v343
    %v374 = vpop.xlane.xlu0 %373
    %375 = vadd.xlane.f32.xlu0 %v344
    %v376 = vpop.xlane.xlu0 %375
    %vm377 = vcmask 7168
    %378 = vst.msk [vmem:[#allocation11] sm:$0xff] %vm377, %v346
    %379 = vst.msk [vmem:[#allocation11 + $0x8] sm:$0xff] %vm377, %v348
    %380 = vst.msk [vmem:[#allocation11 + $0x10] sm:$0xff] %vm377, %v350
    %381 = vst.msk [vmem:[#allocation11 + $0x18] sm:$0xff] %vm377, %v352
    %382 = vst.msk [vmem:[#allocation11 + $0x20] sm:$0xff] %vm377, %v354
    %383 = vst.msk [vmem:[#allocation11 + $0x28] sm:$0xff] %vm377, %v356
    %384 = vst.msk [vmem:[#allocation11 + $0x30] sm:$0xff] %vm377, %v358
    %385 = vst.msk [vmem:[#allocation11 + $0x38] sm:$0xff] %vm377, %v360
    %386 = vst.msk [vmem:[#allocation11 + $0x40] sm:$0xff] %vm377, %v362
    %387 = vst.msk [vmem:[#allocation11 + $0x48] sm:$0xff] %vm377, %v364
    %388 = vst.msk [vmem:[#allocation11 + $0x50] sm:$0xff] %vm377, %v366
    %389 = vst.msk [vmem:[#allocation11 + $0x58] sm:$0xff] %vm377, %v368
    %390 = vst.msk [vmem:[#allocation11 + $0x60] sm:$0xff] %vm377, %v370
    %391 = vst.msk [vmem:[#allocation11 + $0x68] sm:$0xff] %vm377, %v372
    %392 = vst.msk [vmem:[#allocation11 + $0x70] sm:$0xff] %vm377, %v374
    %393 = vst.msk [vmem:[#allocation11 + $0x78] sm:$0xff] %vm377, %v376
    %v394 = vpack.c.bf16 %v194, %v191
    %v395 = vpack.c.bf16 %v202, %v199
    %v396 = vpack.c.bf16 %v210, %v207
    %v397 = vpack.c.bf16 %v218, %v215
    %v398 = vpack.c.bf16 %v226, %v223
    %v399 = vpack.c.bf16 %v234, %v231
    %v400 = vpack.c.bf16 %v242, %v239
    %v401 = vpack.c.bf16 %v250, %v247
    %v410 = vunpack.c.l.b16 %v394
    %v411 = vunpack.c.h.b16 %v394
    %v412 = vunpack.c.l.b16 %v395
    %v413 = vunpack.c.h.b16 %v395
    %v414 = vunpack.c.l.b16 %v396
    %v415 = vunpack.c.h.b16 %v396
    %v416 = vunpack.c.l.b16 %v397
    %v417 = vunpack.c.h.b16 %v397
    %v418 = vunpack.c.l.b16 %v398
    %v419 = vunpack.c.h.b16 %v398
    %v420 = vunpack.c.l.b16 %v399
    %v421 = vunpack.c.h.b16 %v399
    %v422 = vunpack.c.l.b16 %v400
    %v423 = vunpack.c.h.b16 %v400
    %v424 = vunpack.c.l.b16 %v401
    %v425 = vunpack.c.h.b16 %v401
    %v426 = vpack.c.b16 %v410, %v410
    %v427 = vpack.c.b16 %v411, %v411
    %v428 = vpack.c.b16 %v412, %v412
    %v429 = vpack.c.b16 %v413, %v413
    %v430 = vpack.c.b16 %v414, %v414
    %v431 = vpack.c.b16 %v415, %v415
    %v432 = vpack.c.b16 %v416, %v416
    %v433 = vpack.c.b16 %v417, %v417
    %v434 = vpack.c.b16 %v418, %v418
    %v435 = vpack.c.b16 %v419, %v419
    %v436 = vpack.c.b16 %v420, %v420
    %v437 = vpack.c.b16 %v421, %v421
    %v438 = vpack.c.b16 %v422, %v422
    %v439 = vpack.c.b16 %v423, %v423
    %v440 = vpack.c.b16 %v424, %v424
    %v441 = vpack.c.b16 %v425, %v425
    %458 = vst [vmem:[#allocation8] sm:$0xf] %v426
    %459 = vst [vmem:[#allocation8 + $0x4] sm:$0xf] %v427
    %460 = vst [vmem:[#allocation8 + $0x8] sm:$0xf] %v428
    %461 = vst [vmem:[#allocation8 + $0xc] sm:$0xf] %v429
    %462 = vst [vmem:[#allocation8 + $0x10] sm:$0xf] %v430
    %463 = vst [vmem:[#allocation8 + $0x14] sm:$0xf] %v431
    %464 = vst [vmem:[#allocation8 + $0x18] sm:$0xf] %v432
    %465 = vst [vmem:[#allocation8 + $0x1c] sm:$0xf] %v433
    %466 = vst [vmem:[#allocation8 + $0x20] sm:$0xf] %v434
    %467 = vst [vmem:[#allocation8 + $0x24] sm:$0xf] %v435
    %468 = vst [vmem:[#allocation8 + $0x28] sm:$0xf] %v436
    %469 = vst [vmem:[#allocation8 + $0x2c] sm:$0xf] %v437
    %470 = vst [vmem:[#allocation8 + $0x30] sm:$0xf] %v438
    %471 = vst [vmem:[#allocation8 + $0x34] sm:$0xf] %v439
    %472 = vst [vmem:[#allocation8 + $0x38] sm:$0xf] %v440
    %473 = vst [vmem:[#allocation8 + $0x3c] sm:$0xf] %v441
    // Predicated region
    $region26: #{tpu_custom_call.1} parent=1 // pred_check
      _
    $region27: #{tpu_custom_call.1} parent=1 // pred_check_branch
      %475 = sbr.rel (0) target = $region29
    $region28: #{tpu_custom_call.1} parent=1 // pred_region
      %s477 = ssub.s32 1024, 1024
      %478 = vsyncadd [#allocation4], %s477
      %s479 = sshll.u32 [#allocation8], 4
      %s480 = int_to_ptr.vmem [resolvable:$true] %s479
      %485 = dma.vmem_to_hbm [thread:$0]  %s480, 1024, %s3, [#allocation4], 64, 64, 4
    $region29: #{tpu_custom_call.1} parent=1 // pred_fallthru
      _
    // Predicated region
    $region30: #{tpu_custom_call.1} parent=1 // pred_check
      _
    $region31: #{tpu_custom_call.1} parent=1 // pred_check_branch
      %487 = sbr.rel (0) target = $region33
    $region32: #{tpu_custom_call.1} parent=1 // pred_region
      %s489 = ssub.s32 16, 16
      %490 = vsyncadd [#allocation10], %s489
      %s492 = sshll.u32 [#allocation9], 4
      %s493 = int_to_ptr.vmem [resolvable:$true] %s492
      %495 = dma.vmem_to_hbm [thread:$0]  %s493, 16, %s4, [#allocation10]
    $region33: #{tpu_custom_call.1} parent=1 // pred_fallthru
      _
    // Predicated region
    $region34: #{tpu_custom_call.1} parent=1 // pred_check
      _
    $region35: #{tpu_custom_call.1} parent=1 // pred_check_branch
      %497 = sbr.rel (0) target = $region37
    $region36: #{tpu_custom_call.1} parent=1 // pred_region
      %s499 = ssub.s32 2048, 2048
      %500 = vsyncadd [#allocation10], %s499
      %s501 = sshll.u32 [#allocation11], 4
      %s502 = int_to_ptr.vmem [resolvable:$true] %s501
      %507 = dma.vmem_to_hbm [thread:$0]  %s502, 2048, %s5, [#allocation10], 128, 128, 8
    $region37: #{tpu_custom_call.1} parent=1 // pred_fallthru
      _
    // Predicated region
    $region38: #{tpu_custom_call.1} parent=1 // pred_check
      _
    $region39: #{tpu_custom_call.1} parent=1 // pred_check_branch
      %509 = sbr.rel (0) target = $region41
    $region40: #{tpu_custom_call.1} parent=1 // pred_region
      %510 = dma.done [#allocation4], 1024
    $region41: #{tpu_custom_call.1} parent=1 // pred_fallthru
      _
    // Predicated region
    $region42: #{tpu_custom_call.1} parent=1 // pred_check
      _
    $region43: #{tpu_custom_call.1} parent=1 // pred_check_branch
      %512 = sbr.rel (0) target = $region45
    $region44: #{tpu_custom_call.1} parent=1 // pred_region
      %513 = dma.done [#allocation10], 16
    $region45: #{tpu_custom_call.1} parent=1 // pred_fallthru
      _
    // Predicated region
    $region46: #{tpu_custom_call.1} parent=1 // pred_check
      _
    $region47: #{tpu_custom_call.1} parent=1 // pred_check_branch
      %515 = sbr.rel (0) target = $region49
    $region48: #{tpu_custom_call.1} parent=1 // pred_region
      %516 = dma.done [#allocation10], 2048
    $region49: #{tpu_custom_call.1} parent=1 // pred_fallthru
      _
    %517 = vsyncpa [#allocation3], 1
    %518 = vsyncpa [#allocation6], 1
    %519 = vsyncpa [#allocation4], 1
    %520 = vsyncpa [#allocation10], 1

</llo_original>
